<compile_context>
chip_gen: v7x
topology: tpu7x:2x2x1
jax: 0.10.0
libtpu: 0.0.40
codegen_flags: <defaults>
</compile_context>

<pallas_src>
import functools

import jax
import jax.numpy as jnp
from jax.experimental import pallas as pl
from jax.experimental.pallas import tpu as pltpu


def _focal_loss_kernel(x_ref, t_ref, *rest, gamma, n_rows, tile_m, has_weight):
    if has_weight:
        w_ref, o_ref = rest
    else:
        (o_ref,) = rest

    i = pl.program_id(0)

    logits = x_ref[...].astype(jnp.float32)      # (TM, C), native dtype -> f32 in vregs
    tgt = t_ref[...]                             # (TM, 1) int32

    # "Gather" at the target class via lane-iota compare (no one-hot f32 temp,
    # no full logp materialization).
    class_ids = jax.lax.broadcasted_iota(jnp.int32, logits.shape, 1)
    hit = class_ids == tgt                       # (TM, C) bool

    # Numerically stable log-softmax evaluated only at the target column.
    m = jnp.max(logits, axis=1, keepdims=True)                               # (TM, 1)
    lse = jnp.log(jnp.sum(jnp.exp(logits - m), axis=1, keepdims=True)) + m   # (TM, 1)
    x_t = jnp.sum(jnp.where(hit, logits, 0.0), axis=1, keepdims=True)        # (TM, 1)
    logp_t = x_t - lse                                                       # (TM, 1)

    if has_weight:
        w_t = w_ref[...].astype(jnp.float32)     # (TM, 1), pre-gathered in the wrapper
        ce = -w_t * logp_t
    else:
        ce = -logp_t                             # (TM, 1), >= 0

    pt = jnp.exp(-ce)
    u = 1.0 - pt

    g = float(gamma)
    if g == int(g) and 0 <= int(g) <= 8:
        # gamma=2 -> u*u : VPU muls instead of EUP log+exp, and no NaN when
        # 1-pt rounds slightly negative.
        mod = jnp.ones_like(u)
        for _ in range(int(g)):
            mod = mod * u
    else:
        mod = jnp.power(jnp.maximum(u, 0.0), g)

    # Tail mask: only this (TM,1) select pays; padded-row garbage stays inside
    # its own row (all reductions are per-row) and is zeroed here.
    row_ids = jax.lax.broadcasted_iota(jnp.int32, (tile_m, 1), 0)
    valid = (i * tile_m + row_ids) < n_rows                      # (TM, 1) bool
    focal = jnp.where(valid, mod * ce, 0.0)                      # (TM, 1)

    # Per-tile partial sum, written as a lane-dense (8,128) block.
    partial = jnp.sum(focal)
    o_ref[...] = jnp.broadcast_to(partial, o_ref.shape).astype(jnp.float32)


def _sublane_align(itemsize):
    # Native sublane packing: f32 -> 8, bf16/f16 -> 16, int8/fp8 -> 32.
    return {4: 8, 2: 16, 1: 32}.get(int(itemsize), 8)


def _vmem_capacity_bytes():
    # Generation-aware: v7x has 64 MiB per TC, v5e/v6e have 128 MiB.
    try:
        info = pltpu.get_tpu_info()
        cap = getattr(info, "vmem_capacity_bytes", None)
        if cap:
            return int(cap)
    except Exception:
        pass
    return 64 * 1024 * 1024   # conservative fallback (v7x per-TC)


def _vmem_limit_bytes():
    # Leave headroom: ~48 MiB on v7x (64 MiB physical), 64 MiB on v5e/v6e (128 MiB).
    return min((_vmem_capacity_bytes() * 3) // 4, 64 * 1024 * 1024)


def _choose_tile_m(n, c, itemsize):
    # Budget against the *f32* working set: the kernel upcasts and holds ~3-4
    # (TM,C) f32 temporaries on top of the double-buffered native-dtype input,
    # so keep the f32-equivalent logits tile at ~vmem_limit/8 per buffer.
    align = _sublane_align(itemsize)
    budget = _vmem_limit_bytes() // 8
    tm = budget // max(1, c * 4)
    tm = min(tm, 32 * 1024)   # amortize per-step overhead, but keep per-step work sane
    if tm >= n:
        return n
    return max(align, (tm // align) * align)


def focal_loss(inputs, targets, gamma=2.0, weight=None, tile_m=None):
    """inputs: (N, C) float logits (any float dtype); targets: (N,) int class ids."""
    n, c = inputs.shape
    t2d = targets.reshape(n, 1).astype(jnp.int32)

    has_weight = weight is not None
    args = [inputs, t2d]
    in_specs = [
        pl.BlockSpec((None, c), lambda i: (i, 0)),  # placeholder, fixed below
    ]

    if tile_m is None:
        tile_m = _choose_tile_m(n, c, inputs.dtype.itemsize)
    tile_m = min(int(tile_m), n)
    num_tiles = pl.cdiv(n, tile_m)

    in_specs = [
        pl.BlockSpec((tile_m, c), lambda i: (i, 0)),   # logits, native dtype
        pl.BlockSpec((tile_m, 1), lambda i: (i, 0)),   # targets
    ]
    if has_weight:
        # Hoist the per-row class-weight gather out of the kernel.
        w_rows = jnp.asarray(weight, jnp.float32)[targets].reshape(n, 1)
        args.append(w_rows)
        in_specs.append(pl.BlockSpec((tile_m, 1), lambda i: (i, 0)))

    kernel = functools.partial(_focal_loss_kernel, gamma=float(gamma),
                               n_rows=n, tile_m=tile_m, has_weight=has_weight)

    partials = pl.pallas_call(
        kernel,
        out_shape=jax.ShapeDtypeStruct((num_tiles, 8, 128), jnp.float32),
        grid_spec=pltpu.PrefetchScalarGridSpec(
            num_scalar_prefetch=0,
            grid=(num_tiles,),
            in_specs=in_specs,
            out_specs=pl.BlockSpec((1, 8, 128), lambda i: (i, 0, 0)),
        ),
        compiler_params=pltpu.CompilerParams(
            dimension_semantics=("parallel",),      # independent tiles -> megacore-shardable
            vmem_limit_bytes=_vmem_limit_bytes(),   # generation-aware scoped VMEM
        ),
    )(*args)

    # Final reduction with the TRUE row count (not padded-to-tile count).
    return jnp.sum(partials[:, 0, 0]) / n


def _focal_loss_ref(inputs, targets, gamma=2.0, weight=None):
    # Pure-JAX reference mirroring F.cross_entropy(reduction='none', weight=...).
    n, c = inputs.shape
    if weight is None:
        weight = jnp.ones((c,), dtype=jnp.float32)
    logp = jax.nn.log_softmax(inputs.astype(jnp.float32), axis=-1)
    logp_t = jnp.take_along_axis(logp, targets[:, None], axis=1)[:, 0]
    ce = -weight[targets] * logp_t
    pt = jnp.exp(-ce)
    return jnp.mean((1.0 - pt) ** gamma * ce)


if __name__ == "__main__":
    key = jax.random.PRNGKey(0)
    k1, k2, k3, k4 = jax.random.split(key, 4)

    # Test 1: single-tile path, f32 logits, per-class weights.
    N, C = 8, 16
    logits = jax.random.normal(k1, (N, C), dtype=jnp.float32)
    targets = jax.random.randint(k2, (N,), 0, C, dtype=jnp.int32)
    class_weight = jnp.linspace(0.5, 1.5, C, dtype=jnp.float32)

    loss = jax.block_until_ready(focal_loss(logits, targets, 2.0, class_weight))
    ref = _focal_loss_ref(logits, targets, 2.0, class_weight)
    assert jnp.allclose(loss, ref, rtol=1e-5, atol=1e-5), (loss, ref)

    # Test 2: multi-tile path with a ragged tail tile (N=20, tile_m=8 -> 3 tiles),
    # weight=None exercises the no-weight kernel variant (no w input at all).
    N2, C2 = 20, 16
    logits2 = jax.random.normal(k3, (N2, C2), dtype=jnp.float32)
    targets2 = jax.random.randint(k4, (N2,), 0, C2, dtype=jnp.int32)
    loss2 = jax.block_until_ready(focal_loss(logits2, targets2, 2.0, None, tile_m=8))
    ref2 = _focal_loss_ref(logits2, targets2, 2.0, None)
    assert jnp.allclose(loss2, ref2, rtol=1e-5, atol=1e-5), (loss2, ref2)

    # Test 3: native bf16 logits DMA'd as-is (no wrapper-side f32 upcast).
    logits_bf16 = logits.astype(jnp.bfloat16)
    loss3 = jax.block_until_ready(focal_loss(logits_bf16, targets, 2.0, class_weight))
    ref3 = _focal_loss_ref(logits_bf16, targets, 2.0, class_weight)
    assert jnp.allclose(loss3, ref3, rtol=1e-5, atol=1e-5), (loss3, ref3)

    print("KERNEL_OK")
</pallas_src>

<mosaic_0001>
module attributes {stable_mosaic.version = 11 : i64} {
  func.func @_focal_loss_kernel(%arg0: i32, %arg1: memref<8x16xf32, #tpu.memory_space<vmem>>, %arg2: memref<8x1xi32, #tpu.memory_space<vmem>>, %arg3: memref<8x1xf32, #tpu.memory_space<vmem>>, %arg4: memref<1x8x128xf32, #tpu.memory_space<vmem>>) attributes {dimension_semantics = [#tpu.dimension_semantics<parallel>], iteration_bounds = array<i64: 1>, scalar_prefetch = 0 : i64, scratch_operands = 0 : i64, tpu.core_type = #tpu.core_type<tc>, window_params = [{transform_indices = @transform_0, window_bounds = array<i64: 8, 16>}, {transform_indices = @transform_1, window_bounds = array<i64: 8, 1>}, {transform_indices = @transform_2, window_bounds = array<i64: 8, 1>}, {transform_indices = @transform_3, window_bounds = array<i64: 1, 8, 128>}]} {
    %c0 = arith.constant 0 : index
    %c0_0 = arith.constant 0 : index
    %0 = vector.load %arg1[%c0, %c0_0] : memref<8x16xf32, #tpu.memory_space<vmem>>, vector<8x16xf32>
    %c0_1 = arith.constant 0 : index
    %c0_2 = arith.constant 0 : index
    %1 = vector.load %arg2[%c0_1, %c0_2] : memref<8x1xi32, #tpu.memory_space<vmem>>, vector<8x1xi32>
    %2 = tpu.iota {dimensions = array<i32: 1>} : vector<8x16xi32>
    %3 = vector.broadcast %1 : vector<8x1xi32> to vector<8x16xi32>
    %4 = arith.cmpi eq, %2, %3 : vector<8x16xi32>
    %cst = arith.constant dense<0xFF800000> : vector<8xf32>
    %5 = vector.multi_reduction <maximumf>, %0, %cst [1] : vector<8x16xf32> to vector<8xf32>
    %6 = vector.shape_cast %5 : vector<8xf32> to vector<8x1xf32>
    %7 = vector.broadcast %6 : vector<8x1xf32> to vector<8x16xf32>
    %8 = arith.subf %0, %7 : vector<8x16xf32>
    %9 = math.exp %8 : vector<8x16xf32>
    %cst_3 = arith.constant dense<0.000000e+00> : vector<8xf32>
    %10 = vector.multi_reduction <add>, %9, %cst_3 [1] : vector<8x16xf32> to vector<8xf32>
    %11 = vector.shape_cast %10 : vector<8xf32> to vector<8x1xf32>
    %12 = math.log %11 : vector<8x1xf32>
    %13 = arith.addf %12, %6 : vector<8x1xf32>
    %cst_4 = arith.constant 0.000000e+00 : f32
    %14 = vector.broadcast %cst_4 : f32 to vector<8x16xf32>
    %15 = arith.select %4, %0, %14 : vector<8x16xi1>, vector<8x16xf32>
    %cst_5 = arith.constant dense<0.000000e+00> : vector<8xf32>
    %16 = vector.multi_reduction <add>, %15, %cst_5 [1] : vector<8x16xf32> to vector<8xf32>
    %17 = vector.shape_cast %16 : vector<8xf32> to vector<8x1xf32>
    %18 = arith.subf %17, %13 : vector<8x1xf32>
    %c0_6 = arith.constant 0 : index
    %c0_7 = arith.constant 0 : index
    %19 = vector.load %arg3[%c0_6, %c0_7] : memref<8x1xf32, #tpu.memory_space<vmem>>, vector<8x1xf32>
    %cst_8 = arith.constant 0.000000e+00 : f32
    %20 = vector.broadcast %cst_8 : f32 to vector<8x1xf32>
    %21 = arith.subf %20, %19 : vector<8x1xf32>
    %22 = arith.mulf %21, %18 : vector<8x1xf32>
    %cst_9 = arith.constant 0.000000e+00 : f32
    %23 = vector.broadcast %cst_9 : f32 to vector<8x1xf32>
    %24 = arith.subf %23, %22 : vector<8x1xf32>
    %25 = math.exp %24 : vector<8x1xf32>
    %cst_10 = arith.constant 1.000000e+00 : f32
    %26 = vector.broadcast %cst_10 : f32 to vector<8x1xf32>
    %27 = arith.subf %26, %25 : vector<8x1xf32>
    %cst_11 = arith.constant 1.000000e+00 : f32
    %28 = vector.broadcast %cst_11 : f32 to vector<8x1xf32>
    %29 = arith.mulf %28, %27 : vector<8x1xf32>
    %30 = arith.mulf %29, %27 : vector<8x1xf32>
    %31 = tpu.iota {dimensions = array<i32: 0>} : vector<8x1xi32>
    %c8_i32 = arith.constant 8 : i32
    %32 = arith.muli %arg0, %c8_i32 : i32
    %33 = vector.broadcast %32 : i32 to vector<8x1xi32>
    %34 = arith.addi %33, %31 : vector<8x1xi32>
    %c8_i32_12 = arith.constant 8 : i32
    %35 = vector.broadcast %c8_i32_12 : i32 to vector<8x1xi32>
    %36 = arith.cmpi slt, %34, %35 : vector<8x1xi32>
    %37 = arith.mulf %30, %22 : vector<8x1xf32>
    %cst_13 = arith.constant 0.000000e+00 : f32
    %38 = vector.broadcast %cst_13 : f32 to vector<8x1xf32>
    %39 = arith.select %36, %37, %38 : vector<8x1xi1>, vector<8x1xf32>
    %40 = vector.shape_cast %39 : vector<8x1xf32> to vector<1x8x1xf32>
    %cst_14 = arith.constant dense<0.000000e+00> : vector<1xf32>
    %41 = vector.multi_reduction <add>, %40, %cst_14 [1, 2] : vector<1x8x1xf32> to vector<1xf32>
    %42 = vector.shape_cast %41 : vector<1xf32> to vector<1x1x1xf32>
    %43 = vector.extract %42[0, 0, 0] : f32 from vector<1x1x1xf32>
    %44 = vector.broadcast %43 : f32 to vector<1x8x128xf32>
    %c0_15 = arith.constant 0 : index
    %c0_16 = arith.constant 0 : index
    %c0_17 = arith.constant 0 : index
    %45 = vector.load %arg4[%c0_15, %c0_16, %c0_17] : memref<1x8x128xf32, #tpu.memory_space<vmem>>, vector<1x8x128xf32>
    tpu.vector_store %arg4[%c0_15, %c0_16, %c0_17], %44 {strides = array<i32>} : memref<1x8x128xf32, #tpu.memory_space<vmem>>, vector<1x8x128xf32>,
    return
  }
  func.func @transform_0(%arg0: i32) -> (i32, i32) {
    %c0_i32 = arith.constant 0 : i32
    %c0_i32_0 = arith.constant 0 : i32
    return %arg0, %c0_i32 : i32, i32
  }
  func.func @transform_1(%arg0: i32) -> (i32, i32) {
    %c0_i32 = arith.constant 0 : i32
    %c0_i32_0 = arith.constant 0 : i32
    return %arg0, %c0_i32 : i32, i32
  }
  func.func @transform_2(%arg0: i32) -> (i32, i32) {
    %c0_i32 = arith.constant 0 : i32
    %c0_i32_0 = arith.constant 0 : i32
    return %arg0, %c0_i32 : i32, i32
  }
  func.func @transform_3(%arg0: i32) -> (i32, i32, i32) {
    %c0_i32 = arith.constant 0 : i32
    %c0_i32_0 = arith.constant 0 : i32
    %c0_i32_1 = arith.constant 0 : i32
    return %arg0, %c0_i32, %c0_i32_0 : i32, i32, i32
  }
}

</mosaic_0001>

<llo_original>
// kernel: tpu_custom_call.1
$region0: #{tpu_custom_call.1}
  #allocation0 [shape = 'u32[]', space=smem, size = 0x4, offset = 0x4, fixed_abs, tag = 'smem constant byte address 0x4 - core index']
  #allocation1 [shape = 'u32[144,128]{1,0:T(1,128)}', space=vmem, size = 0x12000, scoped, tag = 'internal scratch']
  %s0 = inlined_call_operand.vmem [shape: f32[8,16], index: 0, kind: input, shape index: {}]
  %s1 = inlined_call_operand.vmem [shape: s32[8,1], index: 1, kind: input, shape index: {}]
  %s2 = inlined_call_operand.vmem [shape: f32[8,1], index: 2, kind: input, shape index: {}]
  %s3 = inlined_call_operand.hbm [shape: f32[1,8,128], index: 3, kind: output, shape index: {}]
  %s4 = sld [smem:[#allocation0]]
  $region22: #{tpu_custom_call.1} parent=0
    _
  %s6 = ssub.s32 1, %s4
  %s7 = scalar_select 0, %s6, %s4
  $region1: #{tpu_custom_call.1} parent=0
    #allocation2 [shape = 'u8[4096]{0}', space=vmem, size = 0x1000, scoped, tag = 'output window, operand 0, single buffered']
    #allocation3 [shape = 's32[1]{0}', space=sflag, size = 0x4, scoped, tag = 'scoped memory for tpu_custom_call.1']
    %8 = vsyncpa [#allocation3], 0
    // Predicated region
    $region2: #{tpu_custom_call.1} parent=1 // pred_check
      _
    $region3: #{tpu_custom_call.1} parent=1 // pred_check_branch
      %10 = sbr.rel (0) target = $region5
    $region4: #{tpu_custom_call.1} parent=1 // pred_region
      _
    $region5: #{tpu_custom_call.1} parent=1 // pred_fallthru
      _
    // Predicated region
    $region6: #{tpu_custom_call.1} parent=1 // pred_check
      _
    $region7: #{tpu_custom_call.1} parent=1 // pred_check_branch
      %12 = sbr.rel (0) target = $region9
    $region8: #{tpu_custom_call.1} parent=1 // pred_region
      _
    $region9: #{tpu_custom_call.1} parent=1 // pred_fallthru
      _
    // Predicated region
    $region10: #{tpu_custom_call.1} parent=1 // pred_check
      _
    $region11: #{tpu_custom_call.1} parent=1 // pred_check_branch
      %14 = sbr.rel (0) target = $region13
    $region12: #{tpu_custom_call.1} parent=1 // pred_region
      _
    $region13: #{tpu_custom_call.1} parent=1 // pred_fallthru
      _
    %v15 = vld [vmem:[%s0] sm:$0xff]
    %v16 = vld [vmem:[%s1] sm:$0xff]
    %v17 = vlaneseq
    %v18 = vand.u32 %v17, 127
    %19 = vset.pattern.permute.xlu0 0
    %20 = vperm.xlu0 %19, %v16
    %v21 = vpop.permute.xlu0 %20
    %vm22 = vcmp.eq.s32.totalorder %v18, %v21
    %vm23 = vcmask 130048
    %v24 = vsel %vm23, %v15, -inf
    %25 = vmax.xlane.f32.xlu0 %v24
    %v26 = vpop.xlane.xlu0 %25
    %v27 = vsub.f32 %v15, %v26
    %v28 = vmul.f32 %v27, 1.442695
    %v29 = vpow.pop %v28
    %v30 = vsel %vm23, %v29, 0.0
    %31 = vadd.xlane.f32.xlu0 %v30
    %v32 = vpop.xlane.xlu0 %31
    %v33 = vlog2.pop %v32
    %v34 = vmul.f32 %v33, 0.6931472
    %v35 = vadd.f32 %v34, %v26
    %v36 = vsel %vm22, %v15, 0.0
    %v37 = vsel %vm23, %v36, 0.0
    %38 = vadd.xlane.f32.xlu0 %v37
    %v39 = vpop.xlane.xlu0 %38
    %v40 = vsub.f32 %v39, %v35
    %v41 = vld [vmem:[%s2] sm:$0xff]
    %v42 = vsub.f32 0.0, %v41
    %v43 = vmul.f32 %v42, %v40
    %v44 = vsub.f32 0.0, %v43
    %v45 = vmul.f32 %v44, 1.442695
    %v46 = vpow.pop %v45
    %v47 = vsub.f32 1.0, %v46
    %v48 = vmul.f32 %v47, %v47
    %v49 = vlaneseq
    %v50 = vshrl.u32 %v49, 7
    %s51 = smul.u32 0, 8
    %v52 = vstv %s51
    %v53 = vadd.s32 %v52, %v50
    %vm54 = vcmp.lt.s32.totalorder %v53, 8
    %v55 = vmul.f32 %v48, %v43
    %v56 = vsel %vm54, %v55, 0.0
    %vm57 = vcmask 7168
    %v58 = vsel %vm57, %v56, 0.0
    %59 = vadd.xlane.f32.xlu0 %v58
    %v60 = vpop.xlane.xlu0 %59
    %v61 = vrot.slane %v60, 4
    %v62 = vadd.f32 %v60, %v61
    %v63 = vrot.slane %v62, 2
    %v64 = vadd.f32 %v62, %v63
    %v65 = vrot.slane %v64, 1
    %v66 = vadd.f32 %v64, %v65
    %s67 = vtos %v66
    %v68 = vstv %s67
    %69 = vst [vmem:[#allocation2] sm:$0xff] %v68
    // Predicated region
    $region14: #{tpu_custom_call.1} parent=1 // pred_check
      _
    $region15: #{tpu_custom_call.1} parent=1 // pred_check_branch
      %71 = sbr.rel (0) target = $region17
    $region16: #{tpu_custom_call.1} parent=1 // pred_region
      %s73 = ssub.s32 128, 128
      %74 = vsyncadd [#allocation3], %s73
      %s76 = sshll.u32 [#allocation2], 4
      %s77 = int_to_ptr.vmem [resolvable:$true] %s76
      %79 = dma.vmem_to_hbm [thread:$0]  %s77, 128, %s3, [#allocation3]
    $region17: #{tpu_custom_call.1} parent=1 // pred_fallthru
      _
    // Predicated region
    $region18: #{tpu_custom_call.1} parent=1 // pred_check
      _
    $region19: #{tpu_custom_call.1} parent=1 // pred_check_branch
      %81 = sbr.rel (0) target = $region21
    $region20: #{tpu_custom_call.1} parent=1 // pred_region
      %82 = dma.done [#allocation3], 128
    $region21: #{tpu_custom_call.1} parent=1 // pred_fallthru
      _
    %83 = vsyncpa [#allocation3], 1

</llo_original>
